<compile_context>
chip_gen: v5e
topology: v5e:2x2
jax: 0.10.0
libtpu: 0.0.40
codegen_flags: <defaults>
</compile_context>

<pallas_src>
import jax
import jax.numpy as jnp
import numpy as np
from jax.experimental import pallas as pl
from jax.experimental.pallas import tpu as pltpu


# ----------------------------------------------------------------------------
# generation-aware VMEM budget / tile targets
# ----------------------------------------------------------------------------
def _vmem_capacity_bytes():
    try:
        info = pltpu.get_tpu_info()
        for name in ("vmem_capacity_bytes", "vmem_size_bytes", "vmem_bytes"):
            val = getattr(info, name, None)
            if val:
                return int(val)
    except Exception:
        pass
    return 64 * 1024 * 1024          # conservative fallback (v7x per-core)


_VMEM_CAP = _vmem_capacity_bytes()
_BIG_VMEM = _VMEM_CAP >= 96 * 1024 * 1024          # v5e / v6e: 128 MiB, v7x: 64 MiB
_VMEM_LIMIT = (96 if _BIG_VMEM else 32) * 1024 * 1024
# bigger tiles on 128-MiB parts; capped on v7x so double-buffering still fits.
_QKV_TM, _QKV_TN, _QKV_TK = (512, 1024, 512) if _BIG_VMEM else (256, 512, 512)
_SCORE_TQ, _SCORE_TK = (512, 1024) if _BIG_VMEM else (256, 512)


# ----------------------------------------------------------------------------
# tile-size helpers (fall back to full dim for small shapes; alignment rules:
# sublane dims -> multiple of 8 (16 for bf16 operands), lane dims -> multiple
# of 128, reduction dims must divide exactly)
# ----------------------------------------------------------------------------
def _tile_rows(n, target, mult=8):
    return n if n <= target else max(mult, (target // mult) * mult)


def _tile_lanes(n, target):
    return n if n <= target else max(128, (target // 128) * 128)


def _tile_reduce(n, target):
    if n <= target:
        return n
    t = max(128, (target // 128) * 128)
    while t >= 128:
        if n % t == 0:
            return t
        t -= 128
    return n


# ----------------------------------------------------------------------------
# Kernel 1: qkv linear  y = x @ W + b   (tiled, bf16 MXU operands, f32 acc)
# ----------------------------------------------------------------------------
def qkv_linear(x2d, w, b):
    M, D = x2d.shape
    N = w.shape[1]
    tm = _tile_rows(M, _QKV_TM, mult=16)   # bf16 packs two rows per sublane
    tn = _tile_lanes(N, _QKV_TN)
    tk = _tile_reduce(D, _QKV_TK)
    nk = pl.cdiv(D, tk)

    xb = x2d.astype(jnp.bfloat16)
    wb = w.astype(jnp.bfloat16)
    b2 = b.reshape(1, N).astype(jnp.float32)

    def kernel(x_ref, w_ref, b_ref, o_ref, acc_ref):
        @pl.when(pl.program_id(2) == 0)
        def _():
            acc_ref[...] = jnp.zeros_like(acc_ref)

        acc_ref[...] += jnp.dot(x_ref[...], w_ref[...],
                                preferred_element_type=jnp.float32)

        @pl.when(pl.program_id(2) == nk - 1)
        def _():
            o_ref[...] = (acc_ref[...] + b_ref[...]).astype(o_ref.dtype)

    return pl.pallas_call(
        kernel,
        out_shape=jax.ShapeDtypeStruct((M, N), jnp.float32),
        grid=(pl.cdiv(M, tm), pl.cdiv(N, tn), nk),
        in_specs=[pl.BlockSpec((tm, tk), lambda i, j, k: (i, k)),
                  pl.BlockSpec((tk, tn), lambda i, j, k: (k, j)),
                  pl.BlockSpec((1, tn), lambda i, j, k: (0, j))],
        out_specs=pl.BlockSpec((tm, tn), lambda i, j, k: (i, j)),
        scratch_shapes=[pltpu.VMEM((tm, tn), jnp.float32)],
        compiler_params=pltpu.CompilerParams(
            dimension_semantics=("parallel", "parallel", "arbitrary"),
            vmem_limit_bytes=_VMEM_LIMIT),
    )(xb, wb, b2)


# ----------------------------------------------------------------------------
# Kernel 2: depth-wise 3D conv, stride 1, 'same' zero padding, channel-last,
#           heads folded into the channel axis (C = heads * head_dim).
#           Taps are ref-sliced window loads; accumulation in a VMEM scratch
#           seeded from the first tap.
# ----------------------------------------------------------------------------
def dw_conv3d(x, w2, kshape):
    """x: (B, T, H, W, C) channel-last, w2: (KT*KH*KW, C) per-channel taps."""
    B, T, H, W, C = x.shape
    KT, KH, KW = kshape
    pt, ph, pw = KT // 2, KH // 2, KW // 2
    xp = jnp.pad(x, ((0, 0), (pt, pt), (ph, ph), (pw, pw), (0, 0)))
    Tp, Hp, Wp = T + 2 * pt, H + 2 * ph, W + 2 * pw

    # TODO(synk): halo-tile over T and fold W into the lane axis when C < 128
    #             (large volumes / v7x's 64-MiB VMEM, dual-TC load balance).

    def kernel(xp_ref, w_ref, o_ref, acc_ref):
        wv = w_ref[...]                                  # (KT*KH*KW, C)
        idx = 0
        for kt in range(KT):
            for kh in range(KH):
                for kw in range(KW):
                    # slice the *ref*, not a pre-loaded value: each tap is a
                    # plain offset window load from VMEM (no full-volume
                    # relayout per tap).
                    tap = xp_ref[0, pl.ds(kt, T), pl.ds(kh, H),
                                 pl.ds(kw, W), :] * wv[idx]
                    if idx == 0:                         # seed -> no zero memset
                        acc_ref[...] = tap
                    else:
                        acc_ref[...] += tap
                    idx += 1
        o_ref[0] = acc_ref[...].astype(o_ref.dtype)

    return pl.pallas_call(
        kernel,
        out_shape=jax.ShapeDtypeStruct((B, T, H, W, C), jnp.float32),
        grid=(B,),
        in_specs=[pl.BlockSpec((1, Tp, Hp, Wp, C), lambda n: (n, 0, 0, 0, 0)),
                  pl.BlockSpec((KT * KH * KW, C), lambda n: (0, 0))],
        out_specs=pl.BlockSpec((1, T, H, W, C), lambda n: (n, 0, 0, 0, 0)),
        scratch_shapes=[pltpu.VMEM((T, H, W, C), jnp.float32)],
        compiler_params=pltpu.CompilerParams(
            dimension_semantics=("parallel",),
            vmem_limit_bytes=_VMEM_LIMIT),
    )(xp, w2)


# ----------------------------------------------------------------------------
# Kernel 3: row-wise LayerNorm (PyTorch semantics, eps=1e-5).  Used only for
#           norm_v (q/k LayerNorm is fused into the scores kernel).
# ----------------------------------------------------------------------------
def ln_rows(x2d, g, b, *, eps=1e-5, tr_target=2048):
    R, D = x2d.shape
    tr = _tile_rows(R, tr_target)

    def kernel(x_ref, g_ref, b_ref, o_ref):
        xv = x_ref[...]
        mu = jnp.mean(xv, axis=-1, keepdims=True)
        var = jnp.mean((xv - mu) ** 2, axis=-1, keepdims=True)
        o_ref[...] = ((xv - mu) * jax.lax.rsqrt(var + eps)
                      * g_ref[...] + b_ref[...]).astype(o_ref.dtype)

    return pl.pallas_call(
        kernel,
        out_shape=jax.ShapeDtypeStruct((R, D), jnp.float32),
        grid=(pl.cdiv(R, tr),),
        in_specs=[pl.BlockSpec((tr, D), lambda i: (i, 0)),
                  pl.BlockSpec((1, D), lambda i: (0, 0)),
                  pl.BlockSpec((1, D), lambda i: (0, 0))],
        out_specs=pl.BlockSpec((tr, D), lambda i: (i, 0)),
        compiler_params=pltpu.CompilerParams(
            dimension_semantics=("parallel",),
            vmem_limit_bytes=_VMEM_LIMIT),
    )(x2d, g.reshape(1, D).astype(jnp.float32), b.reshape(1, D).astype(jnp.float32))


# ----------------------------------------------------------------------------
# Kernel 4: fused LayerNorm(q)/LayerNorm(k) + attention scores.
#           qp/kp: (B, L, heads*d) f32 pooled tokens (cls included), heads
#           folded into the channel axis.  The attention scale is pre-folded
#           into q's LN affine params.  K is contracted via dot_general
#           trans-b on the MXU (no wrapper transpose / no HBM round-trip of
#           normalized q/k).  Output: (B, heads, Lq, Lk) f32.
# ----------------------------------------------------------------------------
def fused_ln_scores(qp, kp, g_q, b_q, g_k, b_k, num_heads, head_dim, *, eps=1e-5):
    B, Lq, C = qp.shape
    Lk = kp.shape[1]
    d = head_dim
    tq = _tile_rows(Lq, _SCORE_TQ)
    tk = _tile_lanes(Lk, _SCORE_TK)

    gq = g_q.reshape(1, d).astype(jnp.float32)
    bq = b_q.reshape(1, d).astype(jnp.float32)
    gk = g_k.reshape(1, d).astype(jnp.float32)
    bk = b_k.reshape(1, d).astype(jnp.float32)

    def _ln(xh, g, b):
        mu = jnp.mean(xh, axis=-1, keepdims=True)
        var = jnp.mean((xh - mu) ** 2, axis=-1, keepdims=True)
        return ((xh - mu) * jax.lax.rsqrt(var + eps) * g + b).astype(jnp.bfloat16)

    def kernel(q_ref, k_ref, gq_ref, bq_ref, gk_ref, bk_ref, o_ref):
        qv = q_ref[0]                                    # (tq, C) f32
        kv = k_ref[0]                                    # (tk, C) f32
        for h in range(num_heads):
            lo, hi = h * d, (h + 1) * d
            qn = _ln(qv[:, lo:hi], gq_ref[...], bq_ref[...])   # (tq, d) bf16
            kn = _ln(kv[:, lo:hi], gk_ref[...], bk_ref[...])   # (tk, d) bf16
            # q @ k^T with rhs transposed natively on the MXU.
            o_ref[0, h, :, :] = jax.lax.dot_general(
                qn, kn,
                dimension_numbers=(((1,), (1,)), ((), ())),
                preferred_element_type=jnp.float32).astype(o_ref.dtype)

    return pl.pallas_call(
        kernel,
        out_shape=jax.ShapeDtypeStruct((B, num_heads, Lq, Lk), jnp.float32),
        grid=(B, pl.cdiv(Lq, tq), pl.cdiv(Lk, tk)),
        in_specs=[pl.BlockSpec((1, tq, C), lambda b, i, j: (b, i, 0)),
                  pl.BlockSpec((1, tk, C), lambda b, i, j: (b, j, 0)),
                  pl.BlockSpec((1, d), lambda b, i, j: (0, 0)),
                  pl.BlockSpec((1, d), lambda b, i, j: (0, 0)),
                  pl.BlockSpec((1, d), lambda b, i, j: (0, 0)),
                  pl.BlockSpec((1, d), lambda b, i, j: (0, 0))],
        out_specs=pl.BlockSpec((1, num_heads, tq, tk),
                               lambda b, i, j: (b, 0, i, j)),
        compiler_params=pltpu.CompilerParams(
            dimension_semantics=("parallel", "parallel", "parallel"),
            vmem_limit_bytes=_VMEM_LIMIT),
    )(qp, kp, gq, bq, gk, bk)


# ----------------------------------------------------------------------------
# Full MultiScaleAttention forward (up to attn, as in the given PyTorch code)
# ----------------------------------------------------------------------------
def multi_scale_attention(x, thw, params, num_heads):
    B, L, dim = x.shape
    dim_out = params["w_qkv"].shape[1] // 3
    d = dim_out // num_heads
    C = num_heads * d                       # == dim_out (heads folded in C)
    T, H, W = thw
    KT, KH, KW = params["w_pool_q"].shape[:3]
    K3 = KT * KH * KW

    # qkv = Linear(dim, 3*dim_out, bias=True)(x).  Rows padded to a multiple of
    # 16 so the bf16 MXU operand tiles are sublane-pack aligned.
    M = B * L
    Mp = -(-M // 16) * 16
    x2d = x.reshape(M, dim)
    if Mp != M:
        x2d = jnp.pad(x2d, ((0, Mp - M), (0, 0)))
    qkv2d = qkv_linear(x2d, params["w_qkv"], params["b_qkv"])        # (Mp, 3C)

    # qkv column order is (qkv, head, d) -> q/k/v are contiguous column blocks;
    # heads stay folded in the channel axis (no head-split transposes).
    def split(i):
        return qkv2d[:M, i * C:(i + 1) * C].reshape(B, L, C)

    q_all, k_all, v_all = split(0), split(1), split(2)

    def pool(t_all, wconv):
        # attention_pool: strip cls, depth-wise conv over (T,H,W), re-attach.
        cls_tok = t_all[:, :1, :]                                    # (B, 1, C)
        rest = t_all[:, 1:, :].reshape(B, T, H, W, C)                # pure reshape
        # depthwise weight tiled across heads: channel h*d + j uses wconv[..., j]
        w2 = jnp.tile(wconv.reshape(K3, d), (1, num_heads))          # (K3, C)
        out = dw_conv3d(rest, w2, (KT, KH, KW))                      # (B,T,H,W,C)
        return jnp.concatenate([cls_tok, out.reshape(B, T * H * W, C)], axis=1)

    qp = pool(q_all, params["w_pool_q"])                             # (B, Lq, C)
    kp = pool(k_all, params["w_pool_k"])                             # (B, Lk, C)
    vp = pool(v_all, params["w_pool_v"])                             # (B, Lv, C)
    Lv = vp.shape[1]                                                 # use vp's own length

    # self.scale = head_dim ** 0.5 (exactly as in the reference module);
    # folded into LayerNorm-q affine params -> no extra multiply in-kernel.
    scale = float(d) ** 0.5
    attn = fused_ln_scores(qp, kp,
                           params["g_q"] * scale, params["b_q"] * scale,
                           params["g_k"], params["b_k"],
                           num_heads, d)                             # (B,heads,Lq,Lk)

    # norm_v(v) is computed in the reference forward (even though unused by
    # attn).  (B, Lv, C) -> (B*Lv*heads, d) is a contiguous (free) reshape.
    vn = ln_rows(vp.reshape(B * Lv * num_heads, d),
                 params["g_v"], params["b_v"]).reshape(B, Lv, num_heads, d)
    return attn, vn


# ----------------------------------------------------------------------------
# Pure-JAX reference (mirrors the PyTorch forward and the bf16 MXU casts)
# ----------------------------------------------------------------------------
def reference(x, thw, params, num_heads):
    B, L, dim = x.shape
    dim_out = params["w_qkv"].shape[1] // 3
    d = dim_out // num_heads
    T, H, W = thw

    xb = x.reshape(B * L, dim).astype(jnp.bfloat16).astype(jnp.float32)
    wb = params["w_qkv"].astype(jnp.bfloat16).astype(jnp.float32)
    qkv = xb @ wb + params["b_qkv"]
    qkv = qkv.reshape(B, L, 3, num_heads, d).transpose(2, 0, 3, 1, 4)
    q, k, v = qkv[0], qkv[1], qkv[2]

    def pool(t, wconv):
        cls_tok, rest = t[:, :, :1], t[:, :, 1:]
        r = rest.reshape(B * num_heads, T, H, W, d).transpose(0, 4, 1, 2, 3)   # NCDHW
        wc = jnp.transpose(wconv, (3, 0, 1, 2))[:, None]                       # (C,1,kt,kh,kw)
        pad = [(wconv.shape[0] // 2,) * 2, (wconv.shape[1] // 2,) * 2,
               (wconv.shape[2] // 2,) * 2]
        out = jax.lax.conv_general_dilated(
            r, wc, window_strides=(1, 1, 1), padding=pad,
            dimension_numbers=("NCDHW", "OIDHW", "NCDHW"), feature_group_count=d)
        out = out.transpose(0, 2, 3, 4, 1).reshape(B, num_heads, T * H * W, d)
        return jnp.concatenate([cls_tok, out], axis=2)

    def ln(t, g, b):
        mu = t.mean(-1, keepdims=True)
        var = ((t - mu) ** 2).mean(-1, keepdims=True)
        return (t - mu) * jax.lax.rsqrt(var + 1e-5) * g + b

    scale = float(d) ** 0.5
    qp, kp, vp = (pool(q, params["w_pool_q"]), pool(k, params["w_pool_k"]),
                  pool(v, params["w_pool_v"]))
    qn = ln(qp, params["g_q"] * scale, params["b_q"] * scale
            ).astype(jnp.bfloat16).astype(jnp.float32)
    kn = ln(kp, params["g_k"], params["b_k"]).astype(jnp.bfloat16).astype(jnp.float32)
    vn = ln(vp, params["g_v"], params["b_v"])
    attn = qn @ jnp.swapaxes(kn, -1, -2)
    return attn, vn


# ----------------------------------------------------------------------------
if __name__ == "__main__":
    # Small synthetic config: dim = dim_out = 32, 4 heads -> head_dim = 8,
    # thw_shape = (2, 4, 4), cls token -> L = 1 + 32 = 33, batch = 2.
    # kernel_q = kernel_kv = (3, 3, 3), stride = (1, 1, 1), has_cls_embed=True.
    B, dim, dim_out, num_heads = 2, 32, 32, 4
    head_dim = dim_out // num_heads
    T, H, W = 2, 4, 4
    L = 1 + T * H * W

    key = jax.random.PRNGKey(0)
    keys = jax.random.split(key, 12)
    params = dict(
        w_qkv=jax.random.normal(keys[0], (dim, 3 * dim_out), jnp.float32) * 0.05,
        b_qkv=jax.random.normal(keys[1], (3 * dim_out,), jnp.float32) * 0.02,
        w_pool_q=jax.random.normal(keys[2], (3, 3, 3, head_dim), jnp.float32) * 0.1,
        w_pool_k=jax.random.normal(keys[3], (3, 3, 3, head_dim), jnp.float32) * 0.1,
        w_pool_v=jax.random.normal(keys[4], (3, 3, 3, head_dim), jnp.float32) * 0.1,
        g_q=1.0 + 0.1 * jax.random.normal(keys[5], (head_dim,), jnp.float32),
        b_q=0.1 * jax.random.normal(keys[6], (head_dim,), jnp.float32),
        g_k=1.0 + 0.1 * jax.random.normal(keys[7], (head_dim,), jnp.float32),
        b_k=0.1 * jax.random.normal(keys[8], (head_dim,), jnp.float32),
        g_v=1.0 + 0.1 * jax.random.normal(keys[9], (head_dim,), jnp.float32),
        b_v=0.1 * jax.random.normal(keys[10], (head_dim,), jnp.float32),
    )
    x = jax.random.normal(keys[11], (B, L, dim), jnp.float32)

    attn, vn = multi_scale_attention(x, (T, H, W), params, num_heads)
    attn = jax.block_until_ready(attn)
    vn = jax.block_until_ready(vn)

    attn_ref, vn_ref = reference(x, (T, H, W), params, num_heads)
    # attn tolerance is looser because of bf16 MXU operands (rounding-boundary
    # flips between the Pallas and XLA pooling/LN paths); vn stays f32 end-to-end.
    np.testing.assert_allclose(np.asarray(attn), np.asarray(attn_ref),
                               rtol=2e-2, atol=2e-2)
    # kernel keeps vn head-folded as (B, L, heads, d); reference is (B, heads, L, d)
    np.testing.assert_allclose(np.asarray(jnp.transpose(vn, (0, 2, 1, 3))),
                               np.asarray(vn_ref), rtol=2e-3, atol=2e-3)

    print("KERNEL_OK")
</pallas_src>

<mosaic_0001>
module attributes {stable_mosaic.version = 11 : i64} {
  func.func @kernel(%arg0: i32, %arg1: i32, %arg2: i32, %arg3: memref<80x32xbf16, #tpu.memory_space<vmem>>, %arg4: memref<32x96xbf16, #tpu.memory_space<vmem>>, %arg5: memref<1x96xf32, #tpu.memory_space<vmem>>, %arg6: memref<80x96xf32, #tpu.memory_space<vmem>>, %arg7: memref<80x96xf32, #tpu.memory_space<vmem>>) attributes {dimension_semantics = [#tpu.dimension_semantics<parallel>, #tpu.dimension_semantics<parallel>, #tpu.dimension_semantics<arbitrary>], iteration_bounds = array<i64: 1, 1, 1>, scalar_prefetch = 0 : i64, scratch_operands = 1 : i64, tpu.core_type = #tpu.core_type<tc>, window_params = [{transform_indices = @transform_0, window_bounds = array<i64: 80, 32>}, {transform_indices = @transform_1, window_bounds = array<i64: 32, 96>}, {transform_indices = @transform_2, window_bounds = array<i64: 1, 96>}, {transform_indices = @transform_3, window_bounds = array<i64: 80, 96>}]} {
    %c0_i32 = arith.constant 0 : i32
    %0 = arith.cmpi eq, %arg2, %c0_i32 : i32
    %1 = arith.extui %0 : i1 to i32
    %c0_i32_0 = arith.constant 0 : i32
    %2 = arith.cmpi ne, %1, %c0_i32_0 : i32
    scf.if %2 {
      %cst_10 = arith.constant 0.000000e+00 : f32
      %12 = vector.broadcast %cst_10 : f32 to vector<80x96xf32>
      %c0_11 = arith.constant 0 : index
      %c0_12 = arith.constant 0 : index
      %13 = vector.load %arg7[%c0_11, %c0_12] : memref<80x96xf32, #tpu.memory_space<vmem>>, vector<80x96xf32>
      tpu.vector_store %arg7[%c0_11, %c0_12], %12 {strides = array<i32>} : memref<80x96xf32, #tpu.memory_space<vmem>>, vector<80x96xf32>,
    } else {
    }
    %c0 = arith.constant 0 : index
    %c0_1 = arith.constant 0 : index
    %3 = vector.load %arg7[%c0, %c0_1] : memref<80x96xf32, #tpu.memory_space<vmem>>, vector<80x96xf32>
    %c0_2 = arith.constant 0 : index
    %c0_3 = arith.constant 0 : index
    %4 = vector.load %arg3[%c0_2, %c0_3] : memref<80x32xbf16, #tpu.memory_space<vmem>>, vector<80x32xbf16>
    %c0_4 = arith.constant 0 : index
    %c0_5 = arith.constant 0 : index
    %5 = vector.load %arg4[%c0_4, %c0_5] : memref<32x96xbf16, #tpu.memory_space<vmem>>, vector<32x96xbf16>
    %cst = arith.constant dense<0.000000e+00> : vector<80x96xf32>
    %6 = tpu.matmul %4, %5, %cst {dimension_numbers = #tpu.dot_dimension_numbers<[1], [0], [0], [1], [0, 0, 1, 1], [], []>} : vector<80x32xbf16>, vector<32x96xbf16>, vector<80x96xf32> -> vector<80x96xf32>
    %7 = arith.addf %3, %6 : vector<80x96xf32>
    %c0_6 = arith.constant 0 : index
    %c0_7 = arith.constant 0 : index
    %8 = vector.load %arg7[%c0_6, %c0_7] : memref<80x96xf32, #tpu.memory_space<vmem>>, vector<80x96xf32>
    tpu.vector_store %arg7[%c0_6, %c0_7], %7 {strides = array<i32>} : memref<80x96xf32, #tpu.memory_space<vmem>>, vector<80x96xf32>,
    %c0_i32_8 = arith.constant 0 : i32
    %9 = arith.cmpi eq, %arg2, %c0_i32_8 : i32
    %10 = arith.extui %9 : i1 to i32
    %c0_i32_9 = arith.constant 0 : i32
    %11 = arith.cmpi ne, %10, %c0_i32_9 : i32
    scf.if %11 {
      %c0_10 = arith.constant 0 : index
      %c0_11 = arith.constant 0 : index
      %12 = vector.load %arg7[%c0_10, %c0_11] : memref<80x96xf32, #tpu.memory_space<vmem>>, vector<80x96xf32>
      %c0_12 = arith.constant 0 : index
      %c0_13 = arith.constant 0 : index
      %13 = vector.load %arg5[%c0_12, %c0_13] : memref<1x96xf32, #tpu.memory_space<vmem>>, vector<1x96xf32>
      %14 = vector.broadcast %13 : vector<1x96xf32> to vector<80x96xf32>
      %15 = arith.addf %12, %14 : vector<80x96xf32>
      %c0_14 = arith.constant 0 : index
      %c0_15 = arith.constant 0 : index
      %16 = vector.load %arg6[%c0_14, %c0_15] : memref<80x96xf32, #tpu.memory_space<vmem>>, vector<80x96xf32>
      tpu.vector_store %arg6[%c0_14, %c0_15], %15 {strides = array<i32>} : memref<80x96xf32, #tpu.memory_space<vmem>>, vector<80x96xf32>,
    } else {
    }
    return
  }
  func.func @transform_0(%arg0: i32, %arg1: i32, %arg2: i32) -> (i32, i32) {
    %c0_i32 = arith.constant 0 : i32
    return %arg0, %arg2 : i32, i32
  }
  func.func @transform_1(%arg0: i32, %arg1: i32, %arg2: i32) -> (i32, i32) {
    %c0_i32 = arith.constant 0 : i32
    return %arg2, %arg1 : i32, i32
  }
  func.func @transform_2(%arg0: i32, %arg1: i32, %arg2: i32) -> (i32, i32) {
    %c0_i32 = arith.constant 0 : i32
    %c0_i32_0 = arith.constant 0 : i32
    return %c0_i32, %arg1 : i32, i32
  }
  func.func @transform_3(%arg0: i32, %arg1: i32, %arg2: i32) -> (i32, i32) {
    %c0_i32 = arith.constant 0 : i32
    return %arg0, %arg1 : i32, i32
  }
}

</mosaic_0001>

<llo_original>
// kernel: tpu_custom_call.1
$region0: #{tpu_custom_call.1}
  #allocation0 [shape = 'u32[]', space=smem, size = 0x4, offset = 0x4, fixed_abs, tag = 'smem constant byte address 0x4 - core index']
  #allocation1 [shape = 'u32[72,128]{1,0:T(1,128)}', space=vmem, size = 0x9000, scoped, tag = 'internal scratch']
  #allocation2 [shape = 'f32[80,96]{1,0:T(8,128)}', space=vmem, size = 0xa000, scoped, tag = 'scratch operand']
  %s0 = inlined_call_operand.vmem [shape: bf16[80,32], index: 0, kind: input, shape index: {}]
  %s1 = inlined_call_operand.vmem [shape: bf16[32,96], index: 1, kind: input, shape index: {}]
  %s2 = inlined_call_operand.vmem [shape: f32[1,96], index: 2, kind: input, shape index: {}]
  %s3 = inlined_call_operand.hbm [shape: f32[80,96], index: 3, kind: output, shape index: {}]
  %s4 = sld [smem:[#allocation0]]
  $region30: #{tpu_custom_call.1} parent=0
    _
  %s6 = ssub.s32 1, %s4
  %s7 = scalar_select 0, %s6, %s4
  $region1: #{tpu_custom_call.1} parent=0
    #allocation3 [shape = 'u8[40960]{0}', space=vmem, size = 0xa000, scoped, tag = 'output window, operand 0, single buffered']
    #allocation4 [shape = 's32[1]{0}', space=sflag, size = 0x4, scoped, tag = 'scoped memory for tpu_custom_call.1']
    %8 = vsyncpa [#allocation4], 0
    // Predicated region
    $region2: #{tpu_custom_call.1} parent=1 // pred_check
      _
    $region3: #{tpu_custom_call.1} parent=1 // pred_check_branch
      %10 = sbr.rel (0) target = $region5
    $region4: #{tpu_custom_call.1} parent=1 // pred_region
      _
    $region5: #{tpu_custom_call.1} parent=1 // pred_fallthru
      _
    // Predicated region
    $region6: #{tpu_custom_call.1} parent=1 // pred_check
      _
    $region7: #{tpu_custom_call.1} parent=1 // pred_check_branch
      %12 = sbr.rel (0) target = $region9
    $region8: #{tpu_custom_call.1} parent=1 // pred_region
      _
    $region9: #{tpu_custom_call.1} parent=1 // pred_fallthru
      _
    // Predicated region
    $region10: #{tpu_custom_call.1} parent=1 // pred_check
      _
    $region11: #{tpu_custom_call.1} parent=1 // pred_check_branch
      %14 = sbr.rel (0) target = $region13
    $region12: #{tpu_custom_call.1} parent=1 // pred_region
      _
    $region13: #{tpu_custom_call.1} parent=1 // pred_fallthru
      _
    %p16 = scmp.eq.s32.totalorder 0, 0
    // Predicated region
    $region14: #{tpu_custom_call.1} parent=1 // pred_check
      %p17 = pneg %p16
    $region15: #{tpu_custom_call.1} parent=1 // pred_check_branch
      %19 = sbr.rel (%p17) target = $region17
    $region16: #{tpu_custom_call.1} parent=1 // pred_region
      %vm20 = vcmask 785408
      %21 = vst.msk [vmem:[#allocation2] sm:$0xff] %vm20, 0.0
      %22 = vst.msk [vmem:[#allocation2 + $0x8] sm:$0xff] %vm20, 0.0
      %23 = vst.msk [vmem:[#allocation2 + $0x10] sm:$0xff] %vm20, 0.0
      %24 = vst.msk [vmem:[#allocation2 + $0x18] sm:$0xff] %vm20, 0.0
      %25 = vst.msk [vmem:[#allocation2 + $0x20] sm:$0xff] %vm20, 0.0
      %26 = vst.msk [vmem:[#allocation2 + $0x28] sm:$0xff] %vm20, 0.0
      %27 = vst.msk [vmem:[#allocation2 + $0x30] sm:$0xff] %vm20, 0.0
      %28 = vst.msk [vmem:[#allocation2 + $0x38] sm:$0xff] %vm20, 0.0
      %29 = vst.msk [vmem:[#allocation2 + $0x40] sm:$0xff] %vm20, 0.0
      %30 = vst.msk [vmem:[#allocation2 + $0x48] sm:$0xff] %vm20, 0.0
    $region17: #{tpu_custom_call.1} parent=1 // pred_fallthru
      _
    %v31 = vld [vmem:[#allocation2] sm:$0xff]
    %v32 = vld [vmem:[#allocation2 + $0x8] sm:$0xff]
    %v33 = vld [vmem:[#allocation2 + $0x10] sm:$0xff]
    %v34 = vld [vmem:[#allocation2 + $0x18] sm:$0xff]
    %v35 = vld [vmem:[#allocation2 + $0x20] sm:$0xff]
    %v36 = vld [vmem:[#allocation2 + $0x28] sm:$0xff]
    %v37 = vld [vmem:[#allocation2 + $0x30] sm:$0xff]
    %v38 = vld [vmem:[#allocation2 + $0x38] sm:$0xff]
    %v39 = vld [vmem:[#allocation2 + $0x40] sm:$0xff]
    %v40 = vld [vmem:[#allocation2 + $0x48] sm:$0xff]
    %v41 = vld [vmem:[%s0] sm:$0xf]
    %v42 = vld [vmem:[%s0 + $0x4] sm:$0xf]
    %v43 = vld [vmem:[%s0 + $0x8] sm:$0xf]
    %v44 = vld [vmem:[%s0 + $0xc] sm:$0xf]
    %v45 = vld [vmem:[%s0 + $0x10] sm:$0xf]
    %v46 = vld [vmem:[%s0 + $0x14] sm:$0xf]
    %v47 = vld [vmem:[%s0 + $0x18] sm:$0xf]
    %v48 = vld [vmem:[%s0 + $0x1c] sm:$0xf]
    %v49 = vld [vmem:[%s0 + $0x20] sm:$0xf]
    %v50 = vld [vmem:[%s0 + $0x24] sm:$0xf]
    %v51 = vld [vmem:[%s1] sm:$0xf]
    %v52 = vld [vmem:[%s1 + $0x4] sm:$0xf]
    %v53 = vld [vmem:[%s1 + $0x8] sm:$0xf]
    %v54 = vld [vmem:[%s1 + $0xc] sm:$0xf]
    %v65 = vunpack.c.l.b16 %v41
    %v66 = vunpack.c.l.b16 %v42
    %v67 = vunpack.c.l.b16 %v43
    %v68 = vunpack.c.l.b16 %v44
    %v69 = vunpack.c.l.b16 %v45
    %v70 = vunpack.c.l.b16 %v46
    %v71 = vunpack.c.l.b16 %v47
    %v72 = vunpack.c.l.b16 %v48
    %v73 = vunpack.c.l.b16 %v49
    %v74 = vunpack.c.l.b16 %v50
    %v75 = vpack.c.b16 %v66, %v65
    %v76 = vpack.c.b16 %v68, %v67
    %v77 = vpack.c.b16 %v70, %v69
    %v78 = vpack.c.b16 %v72, %v71
    %v79 = vpack.c.b16 %v74, %v73
    %v84 = vunpack.c.l.b16 %v51
    %v85 = vunpack.c.l.b16 %v52
    %v86 = vunpack.c.l.b16 %v53
    %v87 = vunpack.c.l.b16 %v54
    %v88 = vpack.c.b16 %v85, %v84
    %v89 = vpack.c.b16 %v87, %v86
    %vm92 = vcmask 261120
    %v94 = vsel %vm92, %v75, 0
    %v97 = vsel %vm92, %v76, 0
    %v100 = vsel %vm92, %v77, 0
    %v103 = vsel %vm92, %v78, 0
    %v106 = vsel %vm92, %v79, 0
    %108 = vmatpush.bf16.msra.mxu0 0
    %109 = vmatpush.bf16.msra.mxu0 0
    %110 = vmatpush.bf16.msra.mxu0 0
    %111 = vmatpush.bf16.msra.mxu0 0
    %112 = vmatpush.bf16.msra.mxu0 0
    %113 = vmatpush.bf16.msra.mxu0 0
    %114 = vmatpush.bf16.msra.mxu0 %v89
    %115 = vmatpush.bf16.msra.mxu0 %v88
    %116 = vmatmul.bf16.gmra.mxu0 %v94
    %v117 = vpop.f32.mrf.mxu0
    %v118 = vadd.f32 0.0, %v117
    %v119 = vpop.f32.mrf.mxu0
    %v120 = vadd.f32 0.0, %v119
    %121 = vmatmul.bf16.gmra.mxu0 %v97
    %v122 = vpop.f32.mrf.mxu0
    %v123 = vadd.f32 0.0, %v122
    %v124 = vpop.f32.mrf.mxu0
    %v125 = vadd.f32 0.0, %v124
    %126 = vmatmul.bf16.gmra.mxu0 %v100
    %v127 = vpop.f32.mrf.mxu0
    %v128 = vadd.f32 0.0, %v127
    %v129 = vpop.f32.mrf.mxu0
    %v130 = vadd.f32 0.0, %v129
    %131 = vmatmul.bf16.gmra.mxu0 %v103
    %v132 = vpop.f32.mrf.mxu0
    %v133 = vadd.f32 0.0, %v132
    %v134 = vpop.f32.mrf.mxu0
    %v135 = vadd.f32 0.0, %v134
    %136 = vmatmul.bf16.gmra.mxu0 %v106
    %v137 = vpop.f32.mrf.mxu0
    %v138 = vadd.f32 0.0, %v137
    %v139 = vpop.f32.mrf.mxu0
    %v140 = vadd.f32 0.0, %v139
    %141 = vdwg.mxu0
    %v142 = vadd.f32 %v31, %v118
    %v143 = vadd.f32 %v32, %v120
    %v144 = vadd.f32 %v33, %v123
    %v145 = vadd.f32 %v34, %v125
    %v146 = vadd.f32 %v35, %v128
    %v147 = vadd.f32 %v36, %v130
    %v148 = vadd.f32 %v37, %v133
    %v149 = vadd.f32 %v38, %v135
    %v150 = vadd.f32 %v39, %v138
    %v151 = vadd.f32 %v40, %v140
    %vm152 = vcmask 785408
    %153 = vst.msk [vmem:[#allocation2] sm:$0xff] %vm152, %v142
    %154 = vst.msk [vmem:[#allocation2 + $0x8] sm:$0xff] %vm152, %v143
    %155 = vst.msk [vmem:[#allocation2 + $0x10] sm:$0xff] %vm152, %v144
    %156 = vst.msk [vmem:[#allocation2 + $0x18] sm:$0xff] %vm152, %v145
    %157 = vst.msk [vmem:[#allocation2 + $0x20] sm:$0xff] %vm152, %v146
    %158 = vst.msk [vmem:[#allocation2 + $0x28] sm:$0xff] %vm152, %v147
    %159 = vst.msk [vmem:[#allocation2 + $0x30] sm:$0xff] %vm152, %v148
    %160 = vst.msk [vmem:[#allocation2 + $0x38] sm:$0xff] %vm152, %v149
    %161 = vst.msk [vmem:[#allocation2 + $0x40] sm:$0xff] %vm152, %v150
    %162 = vst.msk [vmem:[#allocation2 + $0x48] sm:$0xff] %vm152, %v151
    // Predicated region
    $region18: #{tpu_custom_call.1} parent=1 // pred_check
      %p163 = pneg %p16
    $region19: #{tpu_custom_call.1} parent=1 // pred_check_branch
      %165 = sbr.rel (%p163) target = $region21
    $region20: #{tpu_custom_call.1} parent=1 // pred_region
      %v166 = vld [vmem:[#allocation2] sm:$0xff]
      %v167 = vld [vmem:[#allocation2 + $0x8] sm:$0xff]
      %v168 = vld [vmem:[#allocation2 + $0x10] sm:$0xff]
      %v169 = vld [vmem:[#allocation2 + $0x18] sm:$0xff]
      %v170 = vld [vmem:[#allocation2 + $0x20] sm:$0xff]
      %v171 = vld [vmem:[#allocation2 + $0x28] sm:$0xff]
      %v172 = vld [vmem:[#allocation2 + $0x30] sm:$0xff]
      %v173 = vld [vmem:[#allocation2 + $0x38] sm:$0xff]
      %v174 = vld [vmem:[#allocation2 + $0x40] sm:$0xff]
      %v175 = vld [vmem:[#allocation2 + $0x48] sm:$0xff]
      %v176 = vld [vmem:[%s2] sm:$0x1]
      %v178 = vperm.slane %v176, 0
      %v180 = vadd.f32 %v166, %v178
      %v181 = vadd.f32 %v167, %v178
      %v182 = vadd.f32 %v168, %v178
      %v183 = vadd.f32 %v169, %v178
      %v184 = vadd.f32 %v170, %v178
      %v185 = vadd.f32 %v171, %v178
      %v186 = vadd.f32 %v172, %v178
      %v187 = vadd.f32 %v173, %v178
      %v188 = vadd.f32 %v174, %v178
      %v189 = vadd.f32 %v175, %v178
      %190 = vst.msk [vmem:[#allocation3] sm:$0xff] %vm152, %v180
      %191 = vst.msk [vmem:[#allocation3 + $0x8] sm:$0xff] %vm152, %v181
      %192 = vst.msk [vmem:[#allocation3 + $0x10] sm:$0xff] %vm152, %v182
      %193 = vst.msk [vmem:[#allocation3 + $0x18] sm:$0xff] %vm152, %v183
      %194 = vst.msk [vmem:[#allocation3 + $0x20] sm:$0xff] %vm152, %v184
      %195 = vst.msk [vmem:[#allocation3 + $0x28] sm:$0xff] %vm152, %v185
      %196 = vst.msk [vmem:[#allocation3 + $0x30] sm:$0xff] %vm152, %v186
      %197 = vst.msk [vmem:[#allocation3 + $0x38] sm:$0xff] %vm152, %v187
      %198 = vst.msk [vmem:[#allocation3 + $0x40] sm:$0xff] %vm152, %v188
      %199 = vst.msk [vmem:[#allocation3 + $0x48] sm:$0xff] %vm152, %v189
    $region21: #{tpu_custom_call.1} parent=1 // pred_fallthru
      _
    // Predicated region
    $region22: #{tpu_custom_call.1} parent=1 // pred_check
      _
    $region23: #{tpu_custom_call.1} parent=1 // pred_check_branch
      %201 = sbr.rel (0) target = $region25
    $region24: #{tpu_custom_call.1} parent=1 // pred_region
      %203 = vsyncadd [#allocation4], 0
      %s204 = sshll.u32 [#allocation3], 4
      %s205 = int_to_ptr.vmem [resolvable:$true] %s204
      %s206 = sshll.u32 %s3, 4
      %s207 = int_to_ptr.hbm [resolvable:$true] %s206
      %212 = dma.vmem_to_hbm [thread:$0]  %s205, 1280, %s207, [#allocation4], 128, 128, 8
    $region25: #{tpu_custom_call.1} parent=1 // pred_fallthru
      _
    // Predicated region
    $region26: #{tpu_custom_call.1} parent=1 // pred_check
      _
    $region27: #{tpu_custom_call.1} parent=1 // pred_check_branch
      %214 = sbr.rel (0) target = $region29
    $region28: #{tpu_custom_call.1} parent=1 // pred_region
      %216 = dma.done [#allocation4], 1280
    $region29: #{tpu_custom_call.1} parent=1 // pred_fallthru
      _
    %217 = vsyncpa [#allocation4], 1

</llo_original>
